<compile_context>
chip_gen: v7x
topology: tpu7x:2x2x1
jax: 0.10.0
libtpu: 0.0.40
codegen_flags: <defaults>
</compile_context>

<pallas_src>
import jax
import jax.numpy as jnp
from jax.experimental import pallas as pl
from jax.experimental.pallas import tpu as pltpu


def _ctx_copy_kernel(ctx_hbm_ref, out_hbm_ref, copy_sem):
    # Forward pass of CoOpPromptLearner: out = ctx.
    # One direct HBM->HBM DMA; no VMEM staging.
    copy = pltpu.make_async_copy(ctx_hbm_ref, out_hbm_ref, copy_sem)
    copy.start()
    copy.wait()


def coop_prompt_learner_forward(ctx: jax.Array) -> jax.Array:
    """Pallas implementation of CoOpPromptLearner.forward().

    ctx: (n_ctx, ctx_dim) float32 parameter. Returns an array equal to ctx.
    Implemented as a single HBM->HBM DMA (no grid, no VMEM round trip).
    """
    # TODO(synk): if the caller donates `ctx` (jax.jit donate_argnums), switch
    # to input_output_aliases={0: 0} with a no-op body to avoid even this copy.
    n_ctx, ctx_dim = ctx.shape
    nbytes = n_ctx * ctx_dim * jnp.dtype(ctx.dtype).itemsize
    return pl.pallas_call(
        _ctx_copy_kernel,
        out_shape=jax.ShapeDtypeStruct((n_ctx, ctx_dim), ctx.dtype),
        in_specs=[pl.BlockSpec(memory_space=pl.ANY)],
        out_specs=pl.BlockSpec(memory_space=pl.ANY),
        scratch_shapes=[pltpu.SemaphoreType.DMA(())],
        cost_estimate=pl.CostEstimate(
            flops=0, transcendentals=0, bytes_accessed=2 * nbytes
        ),
    )(ctx)


def init_ctx(key: jax.Array, n_ctx: int, ctx_dim: int = 512) -> jax.Array:
    """Equivalent of torch.nn.init.normal_(ctx_vectors, std=0.02)."""
    return 0.02 * jax.random.normal(key, (n_ctx, ctx_dim), dtype=jnp.float32)


if __name__ == "__main__":
    # cfg.MODEL.N_CTX = 16 (cfg.MODEL.D_CTX is unused by this module's forward).
    n_ctx, ctx_dim = 16, 512

    key = jax.random.PRNGKey(0)
    ctx = init_ctx(key, n_ctx, ctx_dim)

    out = coop_prompt_learner_forward(ctx)
    out = jax.block_until_ready(out)

    assert out.shape == (n_ctx, ctx_dim)
    assert out.dtype == jnp.float32
    assert bool(jnp.array_equal(out, ctx))

    print("KERNEL_OK")
</pallas_src>

<mosaic_0001>
module attributes {stable_mosaic.version = 11 : i64} {
  func.func @_ctx_copy_kernel(%arg0: memref<16x512xf32, #tpu.memory_space<any>>, %arg1: memref<16x512xf32, #tpu.memory_space<any>>, %arg2: memref<!tpu.dma_semaphore, #tpu.memory_space<semaphore_mem>>) attributes {dimension_semantics = [], scalar_prefetch = 0 : i64, scratch_operands = 1 : i64, tpu.core_type = #tpu.core_type<tc>} {
    tpu.enqueue_dma source(%arg0 : memref<16x512xf32, #tpu.memory_space<any>>) target(%arg1 : memref<16x512xf32, #tpu.memory_space<any>>) target_semaphore(%arg2 : memref<!tpu.dma_semaphore, #tpu.memory_space<semaphore_mem>>)
    tpu.wait_dma2 semaphore(%arg2 : memref<!tpu.dma_semaphore, #tpu.memory_space<semaphore_mem>>) src(%arg0 : memref<16x512xf32, #tpu.memory_space<any>>) dst(%arg1 : memref<16x512xf32, #tpu.memory_space<any>>)
    return
  }
}

</mosaic_0001>

<llo_original>
// kernel: tpu_custom_call.1
$region0: #{tpu_custom_call.1}
  #allocation0 [shape = 'u32[]', space=smem, size = 0x4, offset = 0x4, fixed_abs, tag = 'smem constant byte address 0x4 - core index']
  #allocation1 [shape = 'u32[144,128]{1,0:T(1,128)}', space=vmem, size = 0x12000, scoped, tag = 'internal scratch']
  #allocation2 [shape = 's32[1]{0}', space=sflag, size = 0x4, scoped, tag = 'scratch operand']
  #allocation3 [shape = 's32[]', space=sflag, size = 0x4, offset = 0, fixed_abs, tag = 'sflag constant byte address 0x0 - dummy sync flag']
  #allocation4 [shape = 'u32[0]{0}', space=smem, size = 0, offset = 0, fixed_abs, tag = 'smem constant byte address 0x0 - null']
  %s0 = inlined_call_operand.hbm [shape: f32[16,512], index: 0, kind: input, shape index: {}]
  %s1 = inlined_call_operand.hbm [shape: f32[16,512], index: 1, kind: output, shape index: {}]
  %s2 = sld [smem:[#allocation0]]
  $region2: #{tpu_custom_call.1} parent=0
    _
  %s4 = ssub.s32 1, %s2
  %s5 = scalar_select 0, %s4, %s2
  %s7 = sshll.u32 1, 14
  %s8 = sxor.u32 4294967295, %s7
  %s11 = sshll.u32 3, 24
  %s12 = sxor.u32 4294967295, %s11
  %s13 = sand.u32 0, %s12
  %s15 = sor.u32 %s13, 0
  %18 = dma.general %s0, 1024, %s1, [#allocation2], [#allocation3], [#allocation4], %s15, 0
  %s19 = smul.u32 8, 2
  %s20 = smul.u32 %s19, 4
  %s21 = sshll.u32 %s20, 4
  %22 = dma.done [#allocation2], %s21
  %23 = vsyncmov [#allocation2]
  %s24 = vpop.sfrf %23
  %p25 = scmp.eq.s32.totalorder %s24, 0
  %p26 = pneg %p25
  %28 = shalt.err (%p26)

</llo_original>
